<compile_context>
chip_gen: v7x
topology: tpu7x:2x2x1
jax: 0.10.0
libtpu: 0.0.40
codegen_flags: <defaults>
</compile_context>

<pallas_src>
import math

import jax
import jax.numpy as jnp
from jax.experimental import pallas as pl
from jax.experimental.pallas import tpu as pltpu

_LANE = 128


def _round_up(x, m):
    return ((x + m - 1) // m) * m


def _vmem_caps():
    """(per-step working-set budget, vmem_limit_bytes), with a conservative
    fallback when the chip cannot be queried (e.g. interpret mode)."""
    try:
        cap = int(pltpu.get_tpu_info().vmem_capacity_bytes)
    except Exception:                      # non-TPU / interpret fallback
        cap = 64 * 1024 * 1024             # v7x-sized: smallest of the family
    budget = min(cap // 2, 48 * 1024 * 1024)
    limit = min(int(cap * 0.9), 96 * 1024 * 1024)
    return budget, limit


def _resident_spec(block_shape, index_map):
    """Spec for an operand whose block never changes across the grid:
    single-buffer it to save VMEM (important on v7x)."""
    try:
        return pl.BlockSpec(block_shape, index_map, pipeline_mode=pl.Buffered(1))
    except TypeError:                      # older builds without pipeline_mode
        return pl.BlockSpec(block_shape, index_map)


def _pick_row_tile(hout, halo, wci, wco, w_bytes, out_bytes, budget):
    """Largest row tile (divisor of hout; multiple of 8 unless it is hout
    itself) whose per-step working set fits the VMEM budget."""
    def fits(th):
        tin = th + halo
        x_win = 2 * tin * wci * 2          # (double-)buffered bf16 input window
        o_blk = 2 * th * wco * out_bytes   # double-buffered output block
        acc = th * wco * 4                 # f32 accumulator
        return w_bytes + x_win + o_blk + acc + 2 * wco * 4 <= budget

    cap = min(hout, 256)
    if hout <= cap and fits(hout):
        return hout                        # whole image in a single tile
    th = (cap // 8) * 8
    fallback = None
    while th >= 8:
        if hout % th == 0:
            if fits(th):
                return th
            if fallback is None:
                fallback = th
        th -= 8
    return fallback if fallback is not None else hout


def conv_bn_act(x_nchw, weight_oihw, gamma, beta, running_mean, running_var,
                *, stride=1, padding=0, dilation=1, groups=1, eps=1e-5,
                act="relu", leaky_slope=0.1, out_dtype=None):
    """Forward of Conv(c1, c2, k, s, p, act) in eval mode.

    x_nchw:      (N, Cin, H, W)       float32 (PyTorch layout)
    weight_oihw: (Cout, Cin, K, K)    float32 (PyTorch Conv2d weight)
    returns      (N, Cout, Hout, Wout) out_dtype (default: x dtype)
    """
    assert stride == 1 and dilation == 1 and groups == 1, (
        "only stride=1, dilation=1, groups=1 implemented")
    # TODO(synk): strided / dilated / grouped convolutions not implemented.
    # TODO(synk): BatchNorm uses running statistics (eval-mode semantics);
    # training-mode batch statistics are not implemented.

    N, Cin, H, W = map(int, x_nchw.shape)
    Cout, _, K, Kw = map(int, weight_oihw.shape)
    assert K == Kw
    PAD = int(padding)
    Hout = H + 2 * PAD - K + 1
    Wout = W + 2 * PAD - K + 1
    Hp = H + 2 * PAD                       # height-padded row count
    Wp = W + 2 * PAD
    WCI = W * Cin                          # flattened (width-unpadded) row width

    out_dtype = jnp.dtype(out_dtype) if out_dtype is not None else jnp.dtype(x_nchw.dtype)
    out_bytes = out_dtype.itemsize

    # Pad Cout so the flattened output row Wout*Cout_p is a multiple of 128:
    # lane-dense, unmasked stores for arbitrary configs.
    cpad_unit = _LANE // math.gcd(Wout, _LANE)
    cout_p = _round_up(Cout, cpad_unit)
    WCO = Wout * cout_p

    # ---------------- host-side, one-time glue (plain JAX) ------------------
    # BatchNorm(eval): y = conv*scale + bias, applied in the f32 epilogue so a
    # tiny running_var cannot lose precision through a bf16 weight fold.
    scale = gamma.astype(jnp.float32) / jnp.sqrt(running_var.astype(jnp.float32) + eps)
    bias = beta.astype(jnp.float32) - running_mean.astype(jnp.float32) * scale
    scale_p = jnp.pad(scale, (0, cout_p - Cout))
    bias_p = jnp.pad(bias, (0, cout_p - Cout))
    sb = jnp.stack([jnp.tile(scale_p, Wout), jnp.tile(bias_p, Wout)])  # (2, WCO) f32

    # Block-Toeplitz weight (width zero-padding folded in):
    #   w_big[kh, iw*Cin+cin, w*cout_p+c] = weight[c, cin, kh, kw], kw = iw+PAD-w
    w_hwio = jnp.transpose(weight_oihw, (2, 3, 1, 0)).astype(jnp.float32)  # (K,K,Cin,Cout)
    w_hwio = jnp.pad(w_hwio, ((0, 0), (0, 0), (0, 0), (0, cout_p - Cout)))
    planes = []
    for kh in range(K):
        acc = jnp.zeros((Wp, Cin, Wout, cout_p), jnp.float32)
        for kw in range(K):
            shift = jnp.eye(Wp, Wout, k=-kw, dtype=jnp.float32)   # shift[w+kw, w] = 1
            acc = acc + jnp.einsum("iw,xo->ixwo", shift, w_hwio[kh, kw])
        planes.append(acc.reshape(Wp * Cin, WCO))
    w_big = jnp.stack(planes)[:, PAD * Cin:PAD * Cin + WCI, :].astype(jnp.bfloat16)
    w_bytes = int(w_big.size) * 2

    # Input: NCHW -> NHWC -> (N, H, W*Cin) bf16, height-padded by PAD only.
    x_rows = jnp.transpose(x_nchw, (0, 2, 3, 1)).reshape(N, H, WCI).astype(jnp.bfloat16)
    x_rows = jnp.pad(x_rows, ((0, 0), (PAD, PAD), (0, 0)))

    budget, vmem_limit = _vmem_caps()
    # TODO(synk): per-tap shifted-matmul fallback for very wide images where the
    # O(W^2*Cin*Cout*K) block-Toeplitz weight no longer fits VMEM.
    assert w_bytes <= budget // 2, "block-Toeplitz weight too large for VMEM"

    TH = _pick_row_tile(Hout, K - 1, WCI, WCO, w_bytes, out_bytes, budget)
    assert Hout % TH == 0
    grid_rows = Hout // TH
    TIN = TH + K - 1                       # input rows (incl. halo) per tile

    if act == "relu":
        act_fn = lambda y: jnp.maximum(y, 0.0)
    elif act == "leaky":
        # The module uses nn.LeakyReLU(0.1); slope is a parameter here.
        act_fn = lambda y: jnp.maximum(y, leaky_slope * y)
    elif act is None:
        act_fn = lambda y: y
    else:
        raise ValueError(f"unsupported act: {act}")

    # ----------------------------- kernel bodies ----------------------------
    def _matmul_epilogue(get_rows, w_ref, sb_ref, o_ref):
        # Conv = K back-to-back MXU matmuls (one per kernel row), f32 accum.
        acc = jnp.dot(get_rows(0), w_ref[0], preferred_element_type=jnp.float32)
        for kh in range(1, K):
            acc = acc + jnp.dot(get_rows(kh), w_ref[kh],
                                preferred_element_type=jnp.float32)
        y = acc * sb_ref[0:1, :] + sb_ref[1:2, :]            # BN(eval) in f32
        o_ref[...] = act_fn(y).astype(o_ref.dtype)           # lane-dense store

    def kernel_auto(x_ref, w_ref, sb_ref, o_ref):
        # grid_rows == 1: the whole padded image is an auto-pipelined block,
        # so its HBM fetch is hidden by the Pallas pipeline.
        _matmul_epilogue(lambda kh: x_ref[pl.ds(kh, TH), :], w_ref, sb_ref, o_ref)

    def kernel_manual(x_hbm, w_ref, sb_ref, o_ref, xbuf, sem):
        # grid_rows > 1: manual double-buffered halo-row DMA; tile r+1 is
        # prefetched while tile r is computed (rows = inner "arbitrary" axis).
        n = pl.program_id(0)
        r = pl.program_id(1)
        slot = r % 2

        def start(tile, sl):
            pltpu.make_async_copy(x_hbm.at[n, pl.ds(tile * TH, TIN)],
                                  xbuf.at[sl], sem.at[sl]).start()

        @pl.when(r == 0)
        def _():                           # prime the current slot
            start(0, 0)

        @pl.when(r + 1 < grid_rows)
        def _():                           # prefetch the next row tile
            start(r + 1, 1 - slot)

        pltpu.make_async_copy(x_hbm.at[n, pl.ds(0, TIN)],
                              xbuf.at[slot], sem.at[slot]).wait()

        xw = xbuf.at[slot]
        _matmul_epilogue(lambda kh: xw[pl.ds(kh, TH), :], w_ref, sb_ref, o_ref)

    # ------------------------------ pallas_call -----------------------------
    w_spec = _resident_spec((K, WCI, WCO), lambda n, r: (0, 0, 0))
    sb_spec = _resident_spec((2, WCO), lambda n, r: (0, 0))
    out_spec = pl.BlockSpec((None, TH, WCO), lambda n, r: (n, r, 0))

    if grid_rows == 1:
        kernel = kernel_auto
        x_spec = pl.BlockSpec((None, Hp, WCI), lambda n, r: (n, 0, 0))
        scratch = []
        dim_sem = ("parallel", "parallel")
    else:
        kernel = kernel_manual
        x_spec = pl.BlockSpec(memory_space=pl.ANY)         # raw HBM ref
        scratch = [pltpu.VMEM((2, TIN, WCI), jnp.bfloat16),
                   pltpu.SemaphoreType.DMA((2,))]
        dim_sem = ("parallel", "arbitrary")

    cost = pl.CostEstimate(
        flops=2 * N * Hout * WCI * WCO * K,
        transcendentals=0,
        bytes_accessed=int(x_rows.size) * 2 + N * Hout * WCO * out_bytes
                       + w_bytes + int(sb.size) * 4)

    out_flat = pl.pallas_call(
        kernel,
        out_shape=jax.ShapeDtypeStruct((N, Hout, WCO), out_dtype),
        grid=(N, grid_rows),
        in_specs=[x_spec, w_spec, sb_spec],
        out_specs=out_spec,
        scratch_shapes=scratch,
        compiler_params=pltpu.CompilerParams(
            dimension_semantics=dim_sem,
            vmem_limit_bytes=vmem_limit),
        cost_estimate=cost,
    )(x_rows, w_big, sb)

    out = out_flat.reshape(N, Hout, Wout, cout_p)[..., :Cout]
    return jnp.transpose(out, (0, 3, 1, 2))


if __name__ == "__main__":
    # Module config: Conv(c1=4, c2=8, k=3, s=1, p=1, act=...), eval mode.
    N, C1, H, W = 2, 4, 16, 16
    C2, K, S, P = 8, 3, 1, 1

    key = jax.random.PRNGKey(0)
    kx, kw = jax.random.split(key)
    x = jax.random.normal(kx, (N, C1, H, W), dtype=jnp.float32)
    fan_in = C1 * K * K
    weight = jax.random.normal(kw, (C2, C1, K, K), jnp.float32) * (2.0 / fan_in) ** 0.5

    # BatchNorm2d with non-trivial eval-mode statistics.
    gamma = jnp.full((C2,), 1.1, jnp.float32)
    beta = jnp.full((C2,), 0.05, jnp.float32)
    running_mean = jnp.linspace(-0.2, 0.2, C2, dtype=jnp.float32)
    running_var = jnp.linspace(0.5, 1.5, C2, dtype=jnp.float32)

    # f32 reference: conv -> BN(eval) -> activation.
    ref_conv = jax.lax.conv_general_dilated(
        x, weight, window_strides=(S, S), padding=((P, P), (P, P)),
        dimension_numbers=("NCHW", "OIHW", "NCHW"))
    r_scale = gamma / jnp.sqrt(running_var + 1e-5)
    r_bias = beta - running_mean * r_scale
    bn = ref_conv * r_scale[None, :, None, None] + r_bias[None, :, None, None]
    ref_relu = jnp.maximum(bn, 0.0)
    ref_leaky = jnp.where(bn > 0, bn, 0.1 * bn)

    out = conv_bn_act(x, weight, gamma, beta, running_mean, running_var,
                      stride=S, padding=P, act="relu")
    out = jax.block_until_ready(out)
    assert out.shape == (N, C2, H, W), out.shape
    err = float(jnp.max(jnp.abs(out - ref_relu)))
    assert err < 1e-1, f"relu: max abs error vs reference = {err}"

    # 'leaky' variant with bf16 output (halves the largest HBM stream).
    out_l = conv_bn_act(x, weight, gamma, beta, running_mean, running_var,
                        stride=S, padding=P, act="leaky", out_dtype=jnp.bfloat16)
    out_l = jax.block_until_ready(out_l)
    err_l = float(jnp.max(jnp.abs(out_l.astype(jnp.float32) - ref_leaky)))
    assert err_l < 1.5e-1, f"leaky: max abs error vs reference = {err_l}"

    print("KERNEL_OK")
</pallas_src>

<mosaic_0001>
module attributes {stable_mosaic.version = 11 : i64} {
  func.func @kernel_auto(%arg0: i32, %arg1: i32, %arg2: memref<1x18x64xbf16, #tpu.memory_space<vmem>>, %arg3: memref<3x64x128xbf16, #tpu.memory_space<vmem>>, %arg4: memref<2x128xf32, #tpu.memory_space<vmem>>, %arg5: memref<1x16x128xf32, #tpu.memory_space<vmem>>) attributes {dimension_semantics = [#tpu.dimension_semantics<parallel>, #tpu.dimension_semantics<parallel>], iteration_bounds = array<i64: 2, 1>, scalar_prefetch = 0 : i64, scratch_operands = 0 : i64, tpu.core_type = #tpu.core_type<tc>, window_params = [{transform_indices = @transform_0, window_bounds = array<i64: 1, 18, 64>}, {pipeline_mode = #tpu.pipeline_mode<synchronous>, transform_indices = @transform_1, window_bounds = array<i64: 3, 64, 128>}, {pipeline_mode = #tpu.pipeline_mode<synchronous>, transform_indices = @transform_2, window_bounds = array<i64: 2, 128>}, {transform_indices = @transform_3, window_bounds = array<i64: 1, 16, 128>}]} {
    %c0 = arith.constant 0 : index
    %c0_0 = arith.constant 0 : index
    %c0_1 = arith.constant 0 : index
    %0 = vector.load %arg2[%c0, %c0_0, %c0_1] : memref<1x18x64xbf16, #tpu.memory_space<vmem>>, vector<1x16x64xbf16>
    %1 = vector.shape_cast %0 : vector<1x16x64xbf16> to vector<16x64xbf16>
    %c0_2 = arith.constant 0 : index
    %c0_3 = arith.constant 0 : index
    %c0_4 = arith.constant 0 : index
    %2 = vector.load %arg3[%c0_2, %c0_3, %c0_4] : memref<3x64x128xbf16, #tpu.memory_space<vmem>>, vector<1x64x128xbf16>
    %3 = vector.shape_cast %2 : vector<1x64x128xbf16> to vector<64x128xbf16>
    %cst = arith.constant dense<0.000000e+00> : vector<16x128xf32>
    %4 = tpu.matmul %1, %3, %cst {dimension_numbers = #tpu.dot_dimension_numbers<[1], [0], [0], [1], [0, 0, 1, 1], [], []>} : vector<16x64xbf16>, vector<64x128xbf16>, vector<16x128xf32> -> vector<16x128xf32>
    %c0_5 = arith.constant 0 : index
    %c1 = arith.constant 1 : index
    %c0_6 = arith.constant 0 : index
    %5 = vector.load %arg2[%c0_5, %c1, %c0_6] : memref<1x18x64xbf16, #tpu.memory_space<vmem>>, vector<1x16x64xbf16>
    %6 = vector.shape_cast %5 : vector<1x16x64xbf16> to vector<16x64xbf16>
    %c1_7 = arith.constant 1 : index
    %c0_8 = arith.constant 0 : index
    %c0_9 = arith.constant 0 : index
    %7 = vector.load %arg3[%c1_7, %c0_8, %c0_9] : memref<3x64x128xbf16, #tpu.memory_space<vmem>>, vector<1x64x128xbf16>
    %8 = vector.shape_cast %7 : vector<1x64x128xbf16> to vector<64x128xbf16>
    %cst_10 = arith.constant dense<0.000000e+00> : vector<16x128xf32>
    %9 = tpu.matmul %6, %8, %cst_10 {dimension_numbers = #tpu.dot_dimension_numbers<[1], [0], [0], [1], [0, 0, 1, 1], [], []>} : vector<16x64xbf16>, vector<64x128xbf16>, vector<16x128xf32> -> vector<16x128xf32>
    %10 = arith.addf %4, %9 : vector<16x128xf32>
    %c0_11 = arith.constant 0 : index
    %c2 = arith.constant 2 : index
    %c0_12 = arith.constant 0 : index
    %11 = vector.load %arg2[%c0_11, %c2, %c0_12] : memref<1x18x64xbf16, #tpu.memory_space<vmem>>, vector<1x16x64xbf16>
    %12 = vector.shape_cast %11 : vector<1x16x64xbf16> to vector<16x64xbf16>
    %c2_13 = arith.constant 2 : index
    %c0_14 = arith.constant 0 : index
    %c0_15 = arith.constant 0 : index
    %13 = vector.load %arg3[%c2_13, %c0_14, %c0_15] : memref<3x64x128xbf16, #tpu.memory_space<vmem>>, vector<1x64x128xbf16>
    %14 = vector.shape_cast %13 : vector<1x64x128xbf16> to vector<64x128xbf16>
    %cst_16 = arith.constant dense<0.000000e+00> : vector<16x128xf32>
    %15 = tpu.matmul %12, %14, %cst_16 {dimension_numbers = #tpu.dot_dimension_numbers<[1], [0], [0], [1], [0, 0, 1, 1], [], []>} : vector<16x64xbf16>, vector<64x128xbf16>, vector<16x128xf32> -> vector<16x128xf32>
    %16 = arith.addf %10, %15 : vector<16x128xf32>
    %c0_17 = arith.constant 0 : index
    %c0_18 = arith.constant 0 : index
    %17 = vector.load %arg4[%c0_17, %c0_18] : memref<2x128xf32, #tpu.memory_space<vmem>>, vector<1x128xf32>
    %18 = vector.broadcast %17 : vector<1x128xf32> to vector<16x128xf32>
    %19 = arith.mulf %16, %18 : vector<16x128xf32>
    %c1_19 = arith.constant 1 : index
    %c0_20 = arith.constant 0 : index
    %20 = vector.load %arg4[%c1_19, %c0_20] : memref<2x128xf32, #tpu.memory_space<vmem>>, vector<1x128xf32>
    %21 = vector.broadcast %20 : vector<1x128xf32> to vector<16x128xf32>
    %22 = arith.addf %19, %21 : vector<16x128xf32>
    %cst_21 = arith.constant 0.000000e+00 : f32
    %23 = vector.broadcast %cst_21 : f32 to vector<16x128xf32>
    %24 = arith.maximumf %22, %23 : vector<16x128xf32>
    %c0_22 = arith.constant 0 : index
    %c0_23 = arith.constant 0 : index
    %c0_24 = arith.constant 0 : index
    %25 = vector.load %arg5[%c0_22, %c0_23, %c0_24] : memref<1x16x128xf32, #tpu.memory_space<vmem>>, vector<1x16x128xf32>
    %26 = vector.shape_cast %25 : vector<1x16x128xf32> to vector<16x128xf32>
    %27 = vector.shape_cast %24 : vector<16x128xf32> to vector<1x16x128xf32>
    tpu.vector_store %arg5[%c0_22, %c0_23, %c0_24], %27 {strides = array<i32>} : memref<1x16x128xf32, #tpu.memory_space<vmem>>, vector<1x16x128xf32>,
    return
  }
  func.func @transform_0(%arg0: i32, %arg1: i32) -> (i32, i32, i32) {
    %c0_i32 = arith.constant 0 : i32
    %c0_i32_0 = arith.constant 0 : i32
    %c0_i32_1 = arith.constant 0 : i32
    return %arg0, %c0_i32, %c0_i32_0 : i32, i32, i32
  }
  func.func @transform_1(%arg0: i32, %arg1: i32) -> (i32, i32, i32) {
    %c0_i32 = arith.constant 0 : i32
    %c0_i32_0 = arith.constant 0 : i32
    %c0_i32_1 = arith.constant 0 : i32
    %c0_i32_2 = arith.constant 0 : i32
    return %c0_i32, %c0_i32_0, %c0_i32_1 : i32, i32, i32
  }
  func.func @transform_2(%arg0: i32, %arg1: i32) -> (i32, i32) {
    %c0_i32 = arith.constant 0 : i32
    %c0_i32_0 = arith.constant 0 : i32
    %c0_i32_1 = arith.constant 0 : i32
    return %c0_i32, %c0_i32_0 : i32, i32
  }
  func.func @transform_3(%arg0: i32, %arg1: i32) -> (i32, i32, i32) {
    %c0_i32 = arith.constant 0 : i32
    %c0_i32_0 = arith.constant 0 : i32
    return %arg0, %arg1, %c0_i32 : i32, i32, i32
  }
}

</mosaic_0001>

<llo_original>
// kernel: tpu_custom_call.1
$region0: #{tpu_custom_call.1}
  #allocation0 [shape = 'u32[]', space=smem, size = 0x4, offset = 0x4, fixed_abs, tag = 'smem constant byte address 0x4 - core index']
  #allocation1 [shape = 'u32[144,128]{1,0:T(1,128)}', space=vmem, size = 0x12000, scoped, tag = 'internal scratch']
  %s0 = inlined_call_operand.vmem [shape: bf16[2,18,64], index: 0, kind: input, shape index: {}]
  %s1 = inlined_call_operand.hbm [shape: bf16[3,64,128], index: 1, kind: input, shape index: {}]
  %s2 = inlined_call_operand.vmem [shape: f32[2,128], index: 2, kind: input, shape index: {}]
  %s3 = inlined_call_operand.hbm [shape: f32[2,16,128], index: 3, kind: output, shape index: {}]
  %s4 = sld [smem:[#allocation0]]
  $region49: #{tpu_custom_call.1} parent=0
    _
  %s6 = ssub.s32 1, %s4
  %s7 = scalar_select 0, %s6, %s4
  $region1: #{tpu_custom_call.1} parent=0
    #allocation2 [shape = 'u8[49152]{0}', space=vmem, size = 0xc000, scoped, tag = 'input window, operand 1, single buffered']
    #allocation3 [shape = 's32[2]{0}', space=sflag, size = 0x8, scoped, tag = 'scoped memory for tpu_custom_call.1']
    #allocation4 [shape = 's32[2]{0}', space=sflag, size = 0x8, scoped, tag = 'scoped memory for tpu_custom_call.1']
    #allocation5 [shape = 'u8[16384]{0}', space=vmem, size = 0x4000, scoped, tag = 'output window, operand 0']
    %8 = vsyncpa [#allocation3], 0
    %9 = vsyncpa [#allocation4], 0
    %s10 = scalar_lea.sflag [#allocation4], 1
    %11 = vsyncpa %s10, 0
    loop: start=0, step=1, limit=4
    $region2: #{tpu_custom_call.1} parent=1 // loop_pre_header
      _
    $region3: #{tpu_custom_call.1} parent=1 // loop_header
      %s13 = sphi 0, %s17
      %p14 = scmp.ge.s32.totalorder %s13, 4
      %s20 = sphi 0, %s32
      %s21 = sphi 0, %s28
      %s22 = sphi 0, %s20
      %s23 = sphi 0, %s21
      %s24 = sphi 0, %s22
      %s25 = sphi 0, %s23
      %s35 = sphi 0, %s37
      %s38 = sphi 0, %s35
      %s39 = sphi 0, %s38
      %s55 = sphi 0, %s39
      %s59 = sphi 0, %s59
      %s61 = sphi 0, %s59
      %s62 = sphi 0, %s61
      %s76 = sphi 0, %s62
      %s80 = sphi 0, %s80
      %s82 = sphi 0, %s80
      %s83 = sphi 0, %s82
      %s97 = sphi 0, %s83
      %s105 = sphi 0, %s107
      %s108 = sphi 0, %s105
      %s109 = sphi 0, %s108
      %s125 = sphi 0, %s109
    $region4: #{tpu_custom_call.1} parent=1 // loop_header_branch
      %16 = sbr.rel (%p14) target = $region8
    $region5: #{tpu_custom_call.1} parent=1 // loop_body
      %s18 = ssub.s32 %s13, 1
      %s19 = ssub.s32 %s13, 2
      %s26 = sadd.s32 1, %s21
      %p27 = scmp.ge.s32.totalorder %s26, 1
      %s28 = scalar_select %p27, 0, %s26
      %s29 = sadd.s32 1, %s20
      %s30 = scalar_select %p27, %s29, %s20
      %p31 = scmp.ge.s32.totalorder %s30, 2
      %s32 = scalar_select %p31, 0, %s30
      %s33 = ssub.s32 %s20, %s32
      %p34 = scmp.eq.s32.totalorder %s33, 0
      %s36 = sadd.s32 %s35, 1
      %s37 = scalar_select %p34, %s35, %s36
      %p40 = pneg %p34
      %p41 = scmp.eq.s32.totalorder %s13, 1
      %p42 = por %p40, %p41
      %p43 = scmp.ne.s32.totalorder %s35, %s38
      %p44 = scmp.eq.s32.totalorder %s13, 0
      %p45 = por %p43, %p44
      %p46 = scmp.ne.s32.totalorder %s35, %s38
      %p47 = scmp.eq.s32.totalorder %s18, 1
      %p48 = por %p46, %p47
      %p49 = scmp.ne.s32.totalorder %s38, %s39
      %p50 = scmp.eq.s32.totalorder %s18, 0
      %p51 = por %p49, %p50
      %p52 = scmp.ne.s32.totalorder %s38, %s39
      %p53 = scmp.eq.s32.totalorder %s19, 1
      %p54 = por %p52, %p53
      %p56 = scmp.ne.s32.totalorder %s39, %s55
      %p57 = scmp.eq.s32.totalorder %s19, 0
      %p58 = por %p56, %p57
      %s60 = sadd.s32 %s59, 1
      %p63 = scmp.eq.s32.totalorder %s13, 1
      %p64 = scmp.ne.s32.totalorder %s59, %s61
      %p65 = scmp.eq.s32.totalorder %s13, 0
      %p66 = por %p64, %p65
      %p67 = scmp.ne.s32.totalorder %s59, %s61
      %p68 = scmp.eq.s32.totalorder %s18, 1
      %p69 = por %p67, %p68
      %p70 = scmp.ne.s32.totalorder %s61, %s62
      %p71 = scmp.eq.s32.totalorder %s18, 0
      %p72 = por %p70, %p71
      %p73 = scmp.ne.s32.totalorder %s61, %s62
      %p74 = scmp.eq.s32.totalorder %s19, 1
      %p75 = por %p73, %p74
      %p77 = scmp.ne.s32.totalorder %s62, %s76
      %p78 = scmp.eq.s32.totalorder %s19, 0
      %p79 = por %p77, %p78
      %s81 = sadd.s32 %s80, 1
      %p84 = scmp.eq.s32.totalorder %s13, 1
      %p85 = scmp.ne.s32.totalorder %s80, %s82
      %p86 = scmp.eq.s32.totalorder %s13, 0
      %p87 = por %p85, %p86
      %p88 = scmp.ne.s32.totalorder %s80, %s82
      %p89 = scmp.eq.s32.totalorder %s18, 1
      %p90 = por %p88, %p89
      %p91 = scmp.ne.s32.totalorder %s82, %s83
      %p92 = scmp.eq.s32.totalorder %s18, 0
      %p93 = por %p91, %p92
      %p94 = scmp.ne.s32.totalorder %s82, %s83
      %p95 = scmp.eq.s32.totalorder %s19, 1
      %p96 = por %p94, %p95
      %p98 = scmp.ne.s32.totalorder %s83, %s97
      %p99 = scmp.eq.s32.totalorder %s19, 0
      %p100 = por %p98, %p99
      %s101 = ssub.s32 %s20, %s32
      %s102 = ssub.s32 %s21, %s28
      %s103 = sor.u32 %s101, %s102
      %p104 = scmp.eq.s32.totalorder %s103, 0
      %s106 = sadd.s32 %s105, 1
      %s107 = scalar_select %p104, %s105, %s106
      %p110 = pneg %p104
      %p111 = scmp.eq.s32.totalorder %s13, 1
      %p112 = por %p110, %p111
      %p113 = scmp.ne.s32.totalorder %s105, %s108
      %p114 = scmp.eq.s32.totalorder %s13, 0
      %p115 = por %p113, %p114
      %p116 = scmp.ne.s32.totalorder %s105, %s108
      %p117 = scmp.eq.s32.totalorder %s18, 1
      %p118 = por %p116, %p117
      %p119 = scmp.ne.s32.totalorder %s108, %s109
      %p120 = scmp.eq.s32.totalorder %s18, 0
      %p121 = por %p119, %p120
      %p122 = scmp.ne.s32.totalorder %s108, %s109
      %p123 = scmp.eq.s32.totalorder %s19, 1
      %p124 = por %p122, %p123
      %p126 = scmp.ne.s32.totalorder %s109, %s125
      %p127 = scmp.eq.s32.totalorder %s19, 0
      %p128 = por %p126, %p127
      %p129 = scmp.le.s32.totalorder 1, %s13
      %p130 = scmp.lt.s32.totalorder %s13, 3
      %p131 = pnand %p129, %p130
      %p132 = pneg %p131
      // Predicated region
      $region9: #{tpu_custom_call.1} parent=5 // pred_check
        _
      $region10: #{tpu_custom_call.1} parent=5 // pred_check_branch
        %134 = sbr.rel (%p131) target = $region12
      $region11: #{tpu_custom_call.1} parent=5 // pred_region
        %s135 = ssub.s32 %s13, 1
        // Predicated region
        $region13: #{tpu_custom_call.1} parent=11 // pred_check
          %p136 = pneg %p72
        $region14: #{tpu_custom_call.1} parent=11 // pred_check_branch
          %138 = sbr.rel (%p136) target = $region16
        $region15: #{tpu_custom_call.1} parent=11 // pred_region
          %s140 = ssub.s32 1536, 1536
          %141 = vsyncadd [#allocation3], %s140
          %s142 = sshll.u32 [#allocation2], 4
          %s143 = int_to_ptr.vmem [resolvable:$true] %s142
          %148 = dma.hbm_to_vmem [thread:$0]  %s1, 1536, %s143, [#allocation3], 64, 64, 4
        $region16: #{tpu_custom_call.1} parent=11 // pred_fallthru
          _
        // Predicated region
        $region17: #{tpu_custom_call.1} parent=11 // pred_check
          %p149 = pneg %p93
        $region18: #{tpu_custom_call.1} parent=11 // pred_check_branch
          %151 = sbr.rel (%p149) target = $region20
        $region19: #{tpu_custom_call.1} parent=11 // pred_region
          _
        $region20: #{tpu_custom_call.1} parent=11 // pred_fallthru
          _
      $region12: #{tpu_custom_call.1} parent=5 // pred_fallthru
        _
      %p152 = scmp.lt.s32.totalorder %s13, 2
      // Predicated region
      $region21: #{tpu_custom_call.1} parent=5 // pred_check
        %p153 = pneg %p152
      $region22: #{tpu_custom_call.1} parent=5 // pred_check_branch
        %155 = sbr.rel (%p153) target = $region24
      $region23: #{tpu_custom_call.1} parent=5 // pred_region
        // Predicated region
        $region25: #{tpu_custom_call.1} parent=23 // pred_check
          %p156 = pneg %p45
        $region26: #{tpu_custom_call.1} parent=23 // pred_check_branch
          %158 = sbr.rel (%p156) target = $region28
        $region27: #{tpu_custom_call.1} parent=23 // pred_region
          %p159 = scmp.lt.s32.totalorder %s20, 1
          %s160 = scalar_select %p159, %s20, 1
          %s161 = smul.addr %s160, 3
          %s162 = smul.addr %s161, 4
          %s163 = scalar_lea.vmem %s0, %s162
        $region28: #{tpu_custom_call.1} parent=23 // pred_fallthru
          _
      $region24: #{tpu_custom_call.1} parent=5 // pred_fallthru
        _
      %p164 = scmp.le.s32.totalorder 1, %s13
      %p165 = scmp.lt.s32.totalorder %s13, 3
      %p166 = pnand %p164, %p165
      %p167 = pneg %p166
      // Predicated region
      $region29: #{tpu_custom_call.1} parent=5 // pred_check
        _
      $region30: #{tpu_custom_call.1} parent=5 // pred_check_branch
        %169 = sbr.rel (%p166) target = $region32
      $region31: #{tpu_custom_call.1} parent=5 // pred_region
        %s170 = ssub.s32 %s13, 1
        // Predicated region
        $region33: #{tpu_custom_call.1} parent=31 // pred_check
          %p171 = pneg %p72
        $region34: #{tpu_custom_call.1} parent=31 // pred_check_branch
          %173 = sbr.rel (%p171) target = $region36
        $region35: #{tpu_custom_call.1} parent=31 // pred_region
          %174 = dma.done [#allocation3], 1536
        $region36: #{tpu_custom_call.1} parent=31 // pred_fallthru
          _
        %p175 = scmp.lt.s32.totalorder %s22, 1
        %s176 = scalar_select %p175, %s22, 1
        %s177 = smul.addr %s176, 3
        %s178 = smul.addr %s177, 4
        %s179 = scalar_lea.vmem %s0, %s178
        %p180 = pneg %p51
        %p181 = pneg %p48
        %p182 = pneg %p72
        %p183 = pneg %p69
        %p184 = pneg %p93
        %p185 = pneg %p90
        %p186 = pneg %p121
        %p187 = pneg %p118
        %s188 = sand.u32 %s108, 1
        %s189 = scalar_lea.sflag [#allocation4], %s188
        %s190 = sand.u32 %s108, 1
        %s191 = smul.addr %s190, 16
        %s192 = scalar_lea.vmem [#allocation5], %s191
        %p193 = scmp.lt.s32.totalorder %s22, 1
        %s194 = scalar_select %p193, %s22, 1
        %s195 = smul.addr %s194, 3
        %s196 = smul.addr %s195, 4
        %s197 = scalar_lea.vmem %s0, %s196
        %s198 = smul.u32 2, %s23
        %v200 = vld [vmem:[%s197] sm:$0xf]
        %v201 = vld [vmem:[%s197 + $0x4] sm:$0xf]
        %v202 = vld [vmem:[#allocation2] sm:$0xf]
        %v203 = vld [vmem:[#allocation2 + $0x4] sm:$0xf]
        %v204 = vld [vmem:[#allocation2 + $0x8] sm:$0xf]
        %v205 = vld [vmem:[#allocation2 + $0xc] sm:$0xf]
        %v206 = vld [vmem:[#allocation2 + $0x10] sm:$0xf]
        %v207 = vld [vmem:[#allocation2 + $0x14] sm:$0xf]
        %v208 = vld [vmem:[#allocation2 + $0x18] sm:$0xf]
        %v209 = vld [vmem:[#allocation2 + $0x1c] sm:$0xf]
        %v210 = vld [vmem:[%s197 + $0x8] sm:$0x1]
        %s211 = scalar_lea.vmem [#allocation2], 32
        %v212 = vld [vmem:[%s211] sm:$0xf]
        %v213 = vld [vmem:[%s211 + $0x4] sm:$0xf]
        %v214 = vld [vmem:[%s211 + $0x8] sm:$0xf]
        %v215 = vld [vmem:[%s211 + $0xc] sm:$0xf]
        %v216 = vld [vmem:[%s211 + $0x10] sm:$0xf]
        %v217 = vld [vmem:[%s211 + $0x14] sm:$0xf]
        %v218 = vld [vmem:[%s211 + $0x18] sm:$0xf]
        %v219 = vld [vmem:[%s211 + $0x1c] sm:$0xf]
        %v223 = vunpack.c.l.b16 %v200
        %v224 = vunpack.c.l.b16 %v201
        %v225 = vunpack.c.l.b16 %v210
        %v226 = vpack.c.b16 %v224, %v223
        %v227 = vpack.c.b16 %v225, %v225
        %vm228 = vsmask.f32 7424
        %v230 = vshrl.u32 %v226, 16
        %v232 = vshll.u32 %v226, 16
        %v234 = vrot.slane %v232, 1
        %v235 = vor.u32 %v230, %v234
        %v237 = vshll.u32 %v227, 16
        %v239 = vrot.slane %v237, 1
        %v240 = vsel %vm228, %v235, %v239
        %v249 = vunpack.c.l.b16 %v212
        %v250 = vunpack.c.l.b16 %v213
        %v251 = vunpack.c.l.b16 %v214
        %v252 = vunpack.c.l.b16 %v215
        %v253 = vunpack.c.l.b16 %v216
        %v254 = vunpack.c.l.b16 %v217
        %v255 = vunpack.c.l.b16 %v218
        %v256 = vunpack.c.l.b16 %v219
        %v257 = vpack.c.b16 %v250, %v249
        %v258 = vpack.c.b16 %v252, %v251
        %v259 = vpack.c.b16 %v254, %v253
        %v260 = vpack.c.b16 %v256, %v255
        %vm265 = vcmask 523264
        %v267 = vsel %vm265, %v240, 0
        %269 = vmatprep.subr.bf16.mxu0 0
        %270 = vmatpush1.bf16.msra.mxu0 %v257
        %271 = vmatprep.subr.bf16.mxu0 0
        %272 = vmatpush1.bf16.msra.mxu0 %v258
        %273 = vmatprep.subr.bf16.mxu0 0
        %274 = vmatpush1.bf16.msra.mxu0 %v259
        %275 = vmatprep.subr.bf16.mxu0 0
        %276 = vmatpush1.bf16.msra.mxu0 %v260
        %277 = vmatprep.subr.bf16.mxu0 0
        %278 = vmatpush1.bf16.msra.mxu0 0
        %279 = vmatprep.subr.bf16.mxu0 0
        %280 = vmatpush1.bf16.msra.mxu0 0
        %281 = vmatprep.subr.bf16.mxu0 0
        %282 = vmatpush1.bf16.msra.mxu0 0
        %283 = vmatprep.subr.bf16.mxu0 0
        %284 = vmatpush1.bf16.msra.mxu0 0
        %285 = vmatprep.subr.bf16.mxu0 0
        %286 = vmatpush1.bf16.msra.mxu0 0
        %287 = vmatprep.subr.bf16.mxu0 0
        %288 = vmatpush1.bf16.msra.mxu0 0
        %289 = vmatprep.subr.bf16.mxu0 0
        %290 = vmatpush1.bf16.msra.mxu0 0
        %291 = vmatprep.subr.bf16.mxu0 0
        %292 = vmatpush1.bf16.msra.mxu0 0
        %293 = vmatprep.subr.bf16.mxu0 0
        %294 = vmatpush1.bf16.msra.mxu0 0
        %295 = vmatprep.subr.bf16.mxu0 0
        %296 = vmatpush1.bf16.msra.mxu0 0
        %297 = vmatprep.subr.bf16.mxu0 0
        %298 = vmatpush1.bf16.msra.mxu0 0
        %299 = vmatprep.subr.bf16.mxu0 0
        %300 = vmatpush1.bf16.msra.mxu0 0
        %301 = vmatprep.mubr.bf16.mxu0 0
        %302 = vmatmul.mubr.bf16.gmra.mrb[0].mxu0 %v267
        %v303 = vpop.f32.mrb[0].mxu0
        %v304 = vadd.f32 0.0, %v303
        %v305 = vpop.f32.mrb[0].mxu0
        %v306 = vpop.f32.mrb[0].mxu0
        %v307 = vadd.f32 0.0, %v306
        %v308 = vpop.f32.mrb[0].mxu0
        %309 = vdwg.mxu0
        %v318 = vunpack.c.l.b16 %v202
        %v319 = vunpack.c.l.b16 %v203
        %v320 = vunpack.c.l.b16 %v204
        %v321 = vunpack.c.l.b16 %v205
        %v322 = vunpack.c.l.b16 %v206
        %v323 = vunpack.c.l.b16 %v207
        %v324 = vunpack.c.l.b16 %v208
        %v325 = vunpack.c.l.b16 %v209
        %v326 = vpack.c.b16 %v319, %v318
        %v327 = vpack.c.b16 %v321, %v320
        %v328 = vpack.c.b16 %v323, %v322
        %v329 = vpack.c.b16 %v325, %v324
        %v334 = vsel %vm265, %v226, 0
        %336 = vmatprep.subr.bf16.mxu0 0
        %337 = vmatpush1.bf16.msra.mxu0 %v326
        %338 = vmatprep.subr.bf16.mxu0 0
        %339 = vmatpush1.bf16.msra.mxu0 %v327
        %340 = vmatprep.subr.bf16.mxu0 0
        %341 = vmatpush1.bf16.msra.mxu0 %v328
        %342 = vmatprep.subr.bf16.mxu0 0
        %343 = vmatpush1.bf16.msra.mxu0 %v329
        %344 = vmatprep.subr.bf16.mxu0 0
        %345 = vmatpush1.bf16.msra.mxu0 0
        %346 = vmatprep.subr.bf16.mxu0 0
        %347 = vmatpush1.bf16.msra.mxu0 0
        %348 = vmatprep.subr.bf16.mxu0 0
        %349 = vmatpush1.bf16.msra.mxu0 0
        %350 = vmatprep.subr.bf16.mxu0 0
        %351 = vmatpush1.bf16.msra.mxu0 0
        %352 = vmatprep.subr.bf16.mxu0 0
        %353 = vmatpush1.bf16.msra.mxu0 0
        %354 = vmatprep.subr.bf16.mxu0 0
        %355 = vmatpush1.bf16.msra.mxu0 0
        %356 = vmatprep.subr.bf16.mxu0 0
        %357 = vmatpush1.bf16.msra.mxu0 0
        %358 = vmatprep.subr.bf16.mxu0 0
        %359 = vmatpush1.bf16.msra.mxu0 0
        %360 = vmatprep.subr.bf16.mxu0 0
        %361 = vmatpush1.bf16.msra.mxu0 0
        %362 = vmatprep.subr.bf16.mxu0 0
        %363 = vmatpush1.bf16.msra.mxu0 0
        %364 = vmatprep.subr.bf16.mxu0 0
        %365 = vmatpush1.bf16.msra.mxu0 0
        %366 = vmatprep.subr.bf16.mxu0 0
        %367 = vmatpush1.bf16.msra.mxu0 0
        %368 = vmatprep.mubr.bf16.mxu0 0
        %369 = vmatmul.mubr.bf16.gmra.mrb[0].mxu0 %v334
        %v370 = vpop.f32.mrb[0].mxu0
        %v371 = vadd.f32 %v304, %v370
        %v372 = vpop.f32.mrb[0].mxu0
        %v373 = vpop.f32.mrb[0].mxu0
        %v374 = vadd.f32 %v307, %v373
        %v375 = vpop.f32.mrb[0].mxu0
        %376 = vdwg.mxu0
        %v377 = vld [vmem:[%s197] sm:$0xe]
        %s378 = scalar_lea.vmem [#allocation2], 64
        %v379 = vld [vmem:[%s378] sm:$0xf]
        %v380 = vld [vmem:[%s378 + $0x4] sm:$0xf]
        %v381 = vld [vmem:[%s378 + $0x8] sm:$0xf]
        %v382 = vld [vmem:[%s378 + $0xc] sm:$0xf]
        %v383 = vld [vmem:[%s378 + $0x10] sm:$0xf]
        %v384 = vld [vmem:[%s378 + $0x14] sm:$0xf]
        %v385 = vld [vmem:[%s378 + $0x18] sm:$0xf]
        %v386 = vld [vmem:[%s378 + $0x1c] sm:$0xf]
        %v388 = vunpack.c.l.b16 %v377
        %v389 = vpack.c.b16 %v224, %v388
        %vm390 = vcmask 1046528
        %v391 = vrot.slane %v389, 1
        %v392 = vrot.slane %v227, 1
        %v393 = vsel %vm390, %v391, %v392
        %v402 = vunpack.c.l.b16 %v379
        %v403 = vunpack.c.l.b16 %v380
        %v404 = vunpack.c.l.b16 %v381
        %v405 = vunpack.c.l.b16 %v382
        %v406 = vunpack.c.l.b16 %v383
        %v407 = vunpack.c.l.b16 %v384
        %v408 = vunpack.c.l.b16 %v385
        %v409 = vunpack.c.l.b16 %v386
        %v410 = vpack.c.b16 %v403, %v402
        %v411 = vpack.c.b16 %v405, %v404
        %v412 = vpack.c.b16 %v407, %v406
        %v413 = vpack.c.b16 %v409, %v408
        %v419 = vsel %vm265, %v393, 0
        %421 = vmatprep.subr.bf16.mxu0 0
        %422 = vmatpush1.bf16.msra.mxu0 %v410
        %423 = vmatprep.subr.bf16.mxu0 0
        %424 = vmatpush1.bf16.msra.mxu0 %v411
        %425 = vmatprep.subr.bf16.mxu0 0
        %426 = vmatpush1.bf16.msra.mxu0 %v412
        %427 = vmatprep.subr.bf16.mxu0 0
        %428 = vmatpush1.bf16.msra.mxu0 %v413
        %429 = vmatprep.subr.bf16.mxu0 0
        %430 = vmatpush1.bf16.msra.mxu0 0
        %431 = vmatprep.subr.bf16.mxu0 0
        %432 = vmatpush1.bf16.msra.mxu0 0
        %433 = vmatprep.subr.bf16.mxu0 0
        %434 = vmatpush1.bf16.msra.mxu0 0
        %435 = vmatprep.subr.bf16.mxu0 0
        %436 = vmatpush1.bf16.msra.mxu0 0
        %437 = vmatprep.subr.bf16.mxu0 0
        %438 = vmatpush1.bf16.msra.mxu0 0
        %439 = vmatprep.subr.bf16.mxu0 0
        %440 = vmatpush1.bf16.msra.mxu0 0
        %441 = vmatprep.subr.bf16.mxu0 0
        %442 = vmatpush1.bf16.msra.mxu0 0
        %443 = vmatprep.subr.bf16.mxu0 0
        %444 = vmatpush1.bf16.msra.mxu0 0
        %445 = vmatprep.subr.bf16.mxu0 0
        %446 = vmatpush1.bf16.msra.mxu0 0
        %447 = vmatprep.subr.bf16.mxu0 0
        %448 = vmatpush1.bf16.msra.mxu0 0
        %449 = vmatprep.subr.bf16.mxu0 0
        %450 = vmatpush1.bf16.msra.mxu0 0
        %451 = vmatprep.subr.bf16.mxu0 0
        %452 = vmatpush1.bf16.msra.mxu0 0
        %453 = vmatprep.mubr.bf16.mxu0 0
        %454 = vmatmul.mubr.bf16.gmra.mrb[0].mxu0 %v419
        %v455 = vpop.f32.mrb[0].mxu0
        %v456 = vadd.f32 0.0, %v455
        %v457 = vpop.f32.mrb[0].mxu0
        %v458 = vpop.f32.mrb[0].mxu0
        %v459 = vadd.f32 0.0, %v458
        %v460 = vpop.f32.mrb[0].mxu0
        %461 = vdwg.mxu0
        %v462 = vadd.f32 %v371, %v456
        %v463 = vadd.f32 %v374, %v459
        %v464 = vld [vmem:[%s2] sm:$0x1]
        %v465 = vlaneseq
        %v466 = vshrl.u32 %v465, 7
        %v467 = vsub.s32 0, %v466
        %v468 = vrot.slane %v464, %v467
        %v469 = vmul.f32 %v462, %v468
        %v470 = vmul.f32 %v463, %v468
        %v471 = vld [vmem:[%s2 + $0x1] sm:$0x1]
        %v472 = vlaneseq
        %v473 = vshrl.u32 %v472, 7
        %v474 = vsub.s32 0, %v473
        %v475 = vrot.slane %v471, %v474
        %v476 = vadd.f32 %v469, %v475
        %v477 = vadd.f32 %v470, %v475
        %v478 = vmax.f32 %v476, 0.0
        %v479 = vmax.f32 %v477, 0.0
        %480 = vst [vmem:[%s192] sm:$0xff] %v478
        %481 = vst [vmem:[%s192 + $0x8] sm:$0xff] %v479
        %s482 = sand.u32 %s108, 1
        %s483 = scalar_lea.sflag [#allocation4], %s482
        %s484 = sand.u32 %s108, 1
        %s485 = smul.addr %s484, 16
        %s486 = scalar_lea.vmem [#allocation5], %s485
        // Predicated region
        $region37: #{tpu_custom_call.1} parent=31 // pred_check
          %p487 = pneg %p118
        $region38: #{tpu_custom_call.1} parent=31 // pred_check_branch
          %489 = sbr.rel (%p487) target = $region40
        $region39: #{tpu_custom_call.1} parent=31 // pred_region
          %s490 = smul.u32 2, %s23
          %s492 = ssub.s32 256, 256
          %493 = vsyncadd %s483, %s492
          %s494 = smul.addr %s22, 2
          %s495 = sadd.s32 %s490, %s494
          %s496 = smul.addr %s495, 128
          %s497 = scalar_lea.hbm %s3, %s496
          %s498 = sshll.u32 %s486, 4
          %s499 = int_to_ptr.vmem [resolvable:$true] %s498
          %504 = dma.vmem_to_hbm [thread:$0]  %s499, 256, %s497, %s483, 128, 128, 8
        $region40: #{tpu_custom_call.1} parent=31 // pred_fallthru
          _
      $region32: #{tpu_custom_call.1} parent=5 // pred_fallthru
        _
      %p505 = scmp.le.s32.totalorder 2, %s13
      // Predicated region
      $region41: #{tpu_custom_call.1} parent=5 // pred_check
        %p506 = pneg %p505
      $region42: #{tpu_custom_call.1} parent=5 // pred_check_branch
        %508 = sbr.rel (%p506) target = $region44
      $region43: #{tpu_custom_call.1} parent=5 // pred_region
        %s509 = ssub.s32 %s13, 2
        // Predicated region
        $region45: #{tpu_custom_call.1} parent=43 // pred_check
          %p510 = pneg %p124
        $region46: #{tpu_custom_call.1} parent=43 // pred_check_branch
          %512 = sbr.rel (%p510) target = $region48
        $region47: #{tpu_custom_call.1} parent=43 // pred_region
          %s513 = sand.u32 %s109, 1
          %s514 = scalar_lea.sflag [#allocation4], %s513
          %s515 = sand.u32 %s109, 1
          %s516 = smul.addr %s515, 16
          %s517 = scalar_lea.vmem [#allocation5], %s516
          %518 = dma.done %s514, 256
        $region48: #{tpu_custom_call.1} parent=43 // pred_fallthru
          _
      $region44: #{tpu_custom_call.1} parent=5 // pred_fallthru
        _
    $region6: #{tpu_custom_call.1} parent=1 // loop_footer
      %s17 = sadd.s32 1, %s13
    $region7: #{tpu_custom_call.1} parent=1 // loop_footer_branch
      %12 = sbr.rel target = $region3
    $region8: #{tpu_custom_call.1} parent=1 // loop_exit
      _
    %519 = vsyncpa [#allocation3], 1
    %s520 = scalar_lea.sflag [#allocation3], 1
    %521 = vsyncpa %s520, 1
    %522 = vsyncpa [#allocation4], 1
    %s523 = scalar_lea.sflag [#allocation4], 1
    %524 = vsyncpa %s523, 1

</llo_original>
